<compile_context>
chip_gen: v5e
topology: v5e:2x2
jax: 0.10.0
libtpu: 0.0.40
codegen_flags: <defaults>
</compile_context>

<pallas_src>
import jax
import jax.numpy as jnp
from jax.experimental import pallas as pl
from jax.experimental.pallas import tpu as pltpu

_HALF_LOG_2PI = 0.9189385332046727   # 0.5 * log(2*pi)
_SQRT_HALF = 0.7071067811865476      # sqrt(0.5)

# Per-block x (and out) footprint cap, f32. Double-buffered x + out -> ~4x this,
# which stays under the explicit VMEM limit below on v5e/v6e/v7x.
_MAX_BLOCK_BYTES = 6 * 1024 * 1024
_VMEM_LIMIT_BYTES = 48 * 1024 * 1024


def _gauss_logprob_kernel(x_ref, mu_ref, inv_sigma_ref, bias_ref, o_ref):
    # t = (x - mu) * (sqrt(0.5)/sigma);  out = bias - t*t
    # mu/inv_sigma/bias blocks are (1, block_n) and broadcast over block_b rows.
    t = (x_ref[...] - mu_ref[...]) * inv_sigma_ref[...]
    o_ref[...] = (bias_ref[...] - t * t).astype(o_ref.dtype)


def _round_up(a, m):
    return ((a + m - 1) // m) * m


def _choose_blocks(batch, n):
    """Pick (block_b, block_n, grid_b, grid_n) for a (batch, n) f32 stream."""
    n128 = _round_up(n, 128)
    bytes_per_row = n128 * 4

    # Prefer a full-width (lane-dense, one DMA per row block) tile if 8 rows fit;
    # otherwise tile N with a 128-aligned width no smaller than 512 lanes.
    if 8 * bytes_per_row <= _MAX_BLOCK_BYTES:
        block_n = n128
    else:
        block_n = max(512, ((_MAX_BLOCK_BYTES // (8 * 4)) // 128) * 128)
        block_n = min(block_n, n128)

    rows_cap = max(8, ((_MAX_BLOCK_BYTES // (block_n * 4)) // 8) * 8)
    block_b = min(_round_up(batch, 8), rows_cap)

    grid_b = pl.cdiv(batch, block_b)
    grid_n = pl.cdiv(n, block_n)

    # v7x megacore: ensure >= 2 grid steps along a parallel axis when the shape
    # allows it, so both TensorCores share the stream.
    if grid_b * grid_n < 2:
        if n128 >= 1024:
            block_n = _round_up((n128 + 1) // 2, 128)
            grid_n = pl.cdiv(n, block_n)
        elif batch >= 16:
            block_b = _round_up((batch + 1) // 2, 8)
            grid_b = pl.cdiv(batch, block_b)

    return block_b, block_n, grid_b, grid_n


def gauss_top_tf_forward(x, mu, sigma):
    """Normal(mu, sigma).log_prob(x).

    x: (B, *feat) float32; mu, sigma: (*feat) float32 with sigma > 0.
    """
    B = x.shape[0]
    feat_shape = x.shape[1:]
    N = 1
    for d in feat_shape:
        N *= d

    x2d = x.reshape(B, N)

    # One-time size-N parameter preprocess (hoists 1/sigma and log(sigma) out of
    # the per-row hot path); sqrt(0.5) folded into the scale.
    mu2d = mu.reshape(1, N).astype(jnp.float32)
    inv_sigma_scaled = (_SQRT_HALF / sigma).reshape(1, N).astype(jnp.float32)
    bias = (-(jnp.log(sigma) + _HALF_LOG_2PI)).reshape(1, N).astype(jnp.float32)

    block_b, block_n, grid_b, grid_n = _choose_blocks(B, N)

    out2d = pl.pallas_call(
        _gauss_logprob_kernel,
        out_shape=jax.ShapeDtypeStruct((B, N), x.dtype),
        grid_spec=pltpu.PrefetchScalarGridSpec(
            num_scalar_prefetch=0,
            grid=(grid_b, grid_n),
            in_specs=[
                pl.BlockSpec((block_b, block_n), lambda i, j: (i, j)),  # x (streamed)
                pl.BlockSpec((1, block_n), lambda i, j: (0, j)),        # mu
                pl.BlockSpec((1, block_n), lambda i, j: (0, j)),        # sqrt(.5)/sigma
                pl.BlockSpec((1, block_n), lambda i, j: (0, j)),        # bias term
            ],
            out_specs=pl.BlockSpec((block_b, block_n), lambda i, j: (i, j)),
        ),
        compiler_params=pltpu.CompilerParams(
            dimension_semantics=("parallel", "parallel"),
            vmem_limit_bytes=_VMEM_LIMIT_BYTES,
        ),
    )(x2d, mu2d, inv_sigma_scaled, bias)

    return out2d.reshape((B,) + feat_shape)


def _reference_logprob(x, mu, sigma):
    z = (x - mu) / sigma
    return -0.5 * z * z - jnp.log(sigma) - _HALF_LOG_2PI


# TODO(synk): the full PGM `Model.forward` (dict-driven per-node scalar Gaussians,
# Gauss_condition edge terms, python-loop aggregation over named modules) is
# scalar graph bookkeeping with no useful Pallas mapping; only the Gaussian
# log_prob building block (Gauss_top_TF / Gauss_TG forward) is kernelized here.

if __name__ == "__main__":
    key = jax.random.PRNGKey(0)
    k_x, k_mu, k_sigma, k_x2, k_mu2, k_sigma2 = jax.random.split(key, 6)

    # Main shape (lane-aligned N, ragged batch rows handled in-kernel).
    B, C, H, W = 2, 4, 16, 16
    mu = jax.random.normal(k_mu, (C, H, W), dtype=jnp.float32)
    sigma = jnp.abs(jax.random.normal(k_sigma, (C, H, W), dtype=jnp.float32)) + 0.1
    x = jax.random.normal(k_x, (B, C, H, W), dtype=jnp.float32)

    out = gauss_top_tf_forward(x, mu, sigma)
    out = jax.block_until_ready(out)
    ref = _reference_logprob(x, mu[None], sigma[None])
    assert out.shape == (B, C, H, W)
    assert jnp.allclose(out, ref, atol=1e-5, rtol=1e-5), "mismatch vs reference (aligned shape)"

    # Ragged shape (N not a multiple of 128, B not a multiple of 8) to exercise
    # boundary-block masking replacing the old wrapper pad/slice.
    B2, C2, H2, W2 = 3, 3, 10, 10
    mu2 = jax.random.normal(k_mu2, (C2, H2, W2), dtype=jnp.float32)
    sigma2 = jnp.abs(jax.random.normal(k_sigma2, (C2, H2, W2), dtype=jnp.float32)) + 0.1
    x2 = jax.random.normal(k_x2, (B2, C2, H2, W2), dtype=jnp.float32)

    out2 = gauss_top_tf_forward(x2, mu2, sigma2)
    out2 = jax.block_until_ready(out2)
    ref2 = _reference_logprob(x2, mu2[None], sigma2[None])
    assert out2.shape == (B2, C2, H2, W2)
    assert jnp.allclose(out2, ref2, atol=1e-5, rtol=1e-5), "mismatch vs reference (ragged shape)"

    print("KERNEL_OK")
</pallas_src>

<mosaic_0001>
module attributes {stable_mosaic.version = 11 : i64} {
  func.func @_gauss_logprob_kernel(%arg0: i32, %arg1: i32, %arg2: memref<8x512xf32, #tpu.memory_space<vmem>>, %arg3: memref<1x512xf32, #tpu.memory_space<vmem>>, %arg4: memref<1x512xf32, #tpu.memory_space<vmem>>, %arg5: memref<1x512xf32, #tpu.memory_space<vmem>>, %arg6: memref<8x512xf32, #tpu.memory_space<vmem>>) attributes {dimension_semantics = [#tpu.dimension_semantics<parallel>, #tpu.dimension_semantics<parallel>], iteration_bounds = array<i64: 1, 2>, scalar_prefetch = 0 : i64, scratch_operands = 0 : i64, tpu.core_type = #tpu.core_type<tc>, window_params = [{transform_indices = @transform_0, window_bounds = array<i64: 8, 512>}, {transform_indices = @transform_1, window_bounds = array<i64: 1, 512>}, {transform_indices = @transform_2, window_bounds = array<i64: 1, 512>}, {transform_indices = @transform_3, window_bounds = array<i64: 1, 512>}, {transform_indices = @transform_4, window_bounds = array<i64: 8, 512>}]} {
    %c0 = arith.constant 0 : index
    %c0_0 = arith.constant 0 : index
    %0 = vector.load %arg2[%c0, %c0_0] : memref<8x512xf32, #tpu.memory_space<vmem>>, vector<8x512xf32>
    %c0_1 = arith.constant 0 : index
    %c0_2 = arith.constant 0 : index
    %1 = vector.load %arg3[%c0_1, %c0_2] : memref<1x512xf32, #tpu.memory_space<vmem>>, vector<1x512xf32>
    %2 = vector.broadcast %1 : vector<1x512xf32> to vector<8x512xf32>
    %3 = arith.subf %0, %2 : vector<8x512xf32>
    %c0_3 = arith.constant 0 : index
    %c0_4 = arith.constant 0 : index
    %4 = vector.load %arg4[%c0_3, %c0_4] : memref<1x512xf32, #tpu.memory_space<vmem>>, vector<1x512xf32>
    %5 = vector.broadcast %4 : vector<1x512xf32> to vector<8x512xf32>
    %6 = arith.mulf %3, %5 : vector<8x512xf32>
    %c0_5 = arith.constant 0 : index
    %c0_6 = arith.constant 0 : index
    %7 = vector.load %arg5[%c0_5, %c0_6] : memref<1x512xf32, #tpu.memory_space<vmem>>, vector<1x512xf32>
    %8 = arith.mulf %6, %6 : vector<8x512xf32>
    %9 = vector.broadcast %7 : vector<1x512xf32> to vector<8x512xf32>
    %10 = arith.subf %9, %8 : vector<8x512xf32>
    %c0_7 = arith.constant 0 : index
    %c0_8 = arith.constant 0 : index
    %11 = vector.load %arg6[%c0_7, %c0_8] : memref<8x512xf32, #tpu.memory_space<vmem>>, vector<8x512xf32>
    tpu.vector_store %arg6[%c0_7, %c0_8], %10 {strides = array<i32>} : memref<8x512xf32, #tpu.memory_space<vmem>>, vector<8x512xf32>,
    return
  }
  func.func @transform_0(%arg0: i32, %arg1: i32) -> (i32, i32) {
    %c0_i32 = arith.constant 0 : i32
    return %arg0, %arg1 : i32, i32
  }
  func.func @transform_1(%arg0: i32, %arg1: i32) -> (i32, i32) {
    %c0_i32 = arith.constant 0 : i32
    %c0_i32_0 = arith.constant 0 : i32
    return %c0_i32, %arg1 : i32, i32
  }
  func.func @transform_2(%arg0: i32, %arg1: i32) -> (i32, i32) {
    %c0_i32 = arith.constant 0 : i32
    %c0_i32_0 = arith.constant 0 : i32
    return %c0_i32, %arg1 : i32, i32
  }
  func.func @transform_3(%arg0: i32, %arg1: i32) -> (i32, i32) {
    %c0_i32 = arith.constant 0 : i32
    %c0_i32_0 = arith.constant 0 : i32
    return %c0_i32, %arg1 : i32, i32
  }
  func.func @transform_4(%arg0: i32, %arg1: i32) -> (i32, i32) {
    %c0_i32 = arith.constant 0 : i32
    return %arg0, %arg1 : i32, i32
  }
}

</mosaic_0001>

<llo_original>
// kernel: tpu_custom_call.1
$region0: #{tpu_custom_call.1}
  #allocation0 [shape = 'u32[]', space=smem, size = 0x4, offset = 0x4, fixed_abs, tag = 'smem constant byte address 0x4 - core index']
  #allocation1 [shape = 'u32[72,128]{1,0:T(1,128)}', space=vmem, size = 0x9000, scoped, tag = 'internal scratch']
  %s0 = inlined_call_operand.hbm [shape: f32[2,1024], index: 0, kind: input, shape index: {}]
  %s1 = inlined_call_operand.hbm [shape: f32[1,1024], index: 1, kind: input, shape index: {}]
  %s2 = inlined_call_operand.hbm [shape: f32[1,1024], index: 2, kind: input, shape index: {}]
  %s3 = inlined_call_operand.hbm [shape: f32[1,1024], index: 3, kind: input, shape index: {}]
  %s4 = inlined_call_operand.hbm [shape: f32[2,1024], index: 4, kind: output, shape index: {}]
  %s5 = sld [smem:[#allocation0]]
  $region65: #{tpu_custom_call.1} parent=0
    _
  %s7 = ssub.s32 1, %s5
  %s8 = scalar_select 0, %s7, %s5
  $region1: #{tpu_custom_call.1} parent=0
    #allocation2 [shape = 'u8[32768]{0}', space=vmem, size = 0x8000, scoped, tag = 'input window, operand 0']
    #allocation3 [shape = 's32[2]{0}', space=sflag, size = 0x8, scoped, tag = 'scoped memory for tpu_custom_call.1']
    #allocation4 [shape = 's32[2]{0}', space=sflag, size = 0x8, scoped, tag = 'scoped memory for tpu_custom_call.1']
    #allocation5 [shape = 'u8[4096]{0}', space=vmem, size = 0x1000, scoped, tag = 'input window, operand 1']
    #allocation6 [shape = 's32[2]{0}', space=sflag, size = 0x8, scoped, tag = 'scoped memory for tpu_custom_call.1']
    #allocation7 [shape = 'u8[4096]{0}', space=vmem, size = 0x1000, scoped, tag = 'input window, operand 2']
    #allocation8 [shape = 'u8[4096]{0}', space=vmem, size = 0x1000, scoped, tag = 'input window, operand 3']
    #allocation9 [shape = 's32[2]{0}', space=sflag, size = 0x8, scoped, tag = 'scoped memory for tpu_custom_call.1']
    #allocation10 [shape = 'u8[32768]{0}', space=vmem, size = 0x8000, scoped, tag = 'output window, operand 0']
    %9 = vsyncpa [#allocation3], 0
    %s10 = scalar_lea.sflag [#allocation3], 1
    %11 = vsyncpa %s10, 0
    %12 = vsyncpa [#allocation6], 0
    %s13 = scalar_lea.sflag [#allocation6], 1
    %14 = vsyncpa %s13, 0
    %15 = vsyncpa [#allocation9], 0
    %s16 = scalar_lea.sflag [#allocation9], 1
    %17 = vsyncpa %s16, 0
    %18 = vsyncpa [#allocation4], 0
    %s19 = scalar_lea.sflag [#allocation4], 1
    %20 = vsyncpa %s19, 0
    loop: start=0, step=1, limit=4
    $region2: #{tpu_custom_call.1} parent=1 // loop_pre_header
      _
    $region3: #{tpu_custom_call.1} parent=1 // loop_header
      %s22 = sphi 0, %s26
      %p23 = scmp.ge.s32.totalorder %s22, 4
      %s29 = sphi 0, %s41
      %s30 = sphi 0, %s37
      %s31 = sphi 0, %s29
      %s32 = sphi 0, %s30
      %s33 = sphi 0, %s31
      %s34 = sphi 0, %s32
      %s46 = sphi 0, %s48
      %s49 = sphi 0, %s46
      %s50 = sphi 0, %s49
      %s66 = sphi 0, %s50
      %s72 = sphi 0, %s74
      %s75 = sphi 0, %s72
      %s76 = sphi 0, %s75
      %s92 = sphi 0, %s76
      %s98 = sphi 0, %s100
      %s101 = sphi 0, %s98
      %s102 = sphi 0, %s101
      %s118 = sphi 0, %s102
      %s124 = sphi 0, %s126
      %s127 = sphi 0, %s124
      %s128 = sphi 0, %s127
      %s144 = sphi 0, %s128
      %s152 = sphi 0, %s154
      %s155 = sphi 0, %s152
      %s156 = sphi 0, %s155
      %s172 = sphi 0, %s156
    $region4: #{tpu_custom_call.1} parent=1 // loop_header_branch
      %25 = sbr.rel (%p23) target = $region8
    $region5: #{tpu_custom_call.1} parent=1 // loop_body
      %s27 = ssub.s32 %s22, 1
      %s28 = ssub.s32 %s22, 2
      %s35 = sadd.s32 1, %s30
      %p36 = scmp.ge.s32.totalorder %s35, 2
      %s37 = scalar_select %p36, 0, %s35
      %s38 = sadd.s32 1, %s29
      %s39 = scalar_select %p36, %s38, %s29
      %p40 = scmp.ge.s32.totalorder %s39, 1
      %s41 = scalar_select %p40, 0, %s39
      %s42 = ssub.s32 %s29, %s41
      %s43 = ssub.s32 %s30, %s37
      %s44 = sor.u32 %s42, %s43
      %p45 = scmp.eq.s32.totalorder %s44, 0
      %s47 = sadd.s32 %s46, 1
      %s48 = scalar_select %p45, %s46, %s47
      %p51 = pneg %p45
      %p52 = scmp.eq.s32.totalorder %s22, 1
      %p53 = por %p51, %p52
      %p54 = scmp.ne.s32.totalorder %s46, %s49
      %p55 = scmp.eq.s32.totalorder %s22, 0
      %p56 = por %p54, %p55
      %p57 = scmp.ne.s32.totalorder %s46, %s49
      %p58 = scmp.eq.s32.totalorder %s27, 1
      %p59 = por %p57, %p58
      %p60 = scmp.ne.s32.totalorder %s49, %s50
      %p61 = scmp.eq.s32.totalorder %s27, 0
      %p62 = por %p60, %p61
      %p63 = scmp.ne.s32.totalorder %s49, %s50
      %p64 = scmp.eq.s32.totalorder %s28, 1
      %p65 = por %p63, %p64
      %p67 = scmp.ne.s32.totalorder %s50, %s66
      %p68 = scmp.eq.s32.totalorder %s28, 0
      %p69 = por %p67, %p68
      %s70 = ssub.s32 %s30, %s37
      %p71 = scmp.eq.s32.totalorder %s70, 0
      %s73 = sadd.s32 %s72, 1
      %s74 = scalar_select %p71, %s72, %s73
      %p77 = pneg %p71
      %p78 = scmp.eq.s32.totalorder %s22, 1
      %p79 = por %p77, %p78
      %p80 = scmp.ne.s32.totalorder %s72, %s75
      %p81 = scmp.eq.s32.totalorder %s22, 0
      %p82 = por %p80, %p81
      %p83 = scmp.ne.s32.totalorder %s72, %s75
      %p84 = scmp.eq.s32.totalorder %s27, 1
      %p85 = por %p83, %p84
      %p86 = scmp.ne.s32.totalorder %s75, %s76
      %p87 = scmp.eq.s32.totalorder %s27, 0
      %p88 = por %p86, %p87
      %p89 = scmp.ne.s32.totalorder %s75, %s76
      %p90 = scmp.eq.s32.totalorder %s28, 1
      %p91 = por %p89, %p90
      %p93 = scmp.ne.s32.totalorder %s76, %s92
      %p94 = scmp.eq.s32.totalorder %s28, 0
      %p95 = por %p93, %p94
      %s96 = ssub.s32 %s30, %s37
      %p97 = scmp.eq.s32.totalorder %s96, 0
      %s99 = sadd.s32 %s98, 1
      %s100 = scalar_select %p97, %s98, %s99
      %p103 = pneg %p97
      %p104 = scmp.eq.s32.totalorder %s22, 1
      %p105 = por %p103, %p104
      %p106 = scmp.ne.s32.totalorder %s98, %s101
      %p107 = scmp.eq.s32.totalorder %s22, 0
      %p108 = por %p106, %p107
      %p109 = scmp.ne.s32.totalorder %s98, %s101
      %p110 = scmp.eq.s32.totalorder %s27, 1
      %p111 = por %p109, %p110
      %p112 = scmp.ne.s32.totalorder %s101, %s102
      %p113 = scmp.eq.s32.totalorder %s27, 0
      %p114 = por %p112, %p113
      %p115 = scmp.ne.s32.totalorder %s101, %s102
      %p116 = scmp.eq.s32.totalorder %s28, 1
      %p117 = por %p115, %p116
      %p119 = scmp.ne.s32.totalorder %s102, %s118
      %p120 = scmp.eq.s32.totalorder %s28, 0
      %p121 = por %p119, %p120
      %s122 = ssub.s32 %s30, %s37
      %p123 = scmp.eq.s32.totalorder %s122, 0
      %s125 = sadd.s32 %s124, 1
      %s126 = scalar_select %p123, %s124, %s125
      %p129 = pneg %p123
      %p130 = scmp.eq.s32.totalorder %s22, 1
      %p131 = por %p129, %p130
      %p132 = scmp.ne.s32.totalorder %s124, %s127
      %p133 = scmp.eq.s32.totalorder %s22, 0
      %p134 = por %p132, %p133
      %p135 = scmp.ne.s32.totalorder %s124, %s127
      %p136 = scmp.eq.s32.totalorder %s27, 1
      %p137 = por %p135, %p136
      %p138 = scmp.ne.s32.totalorder %s127, %s128
      %p139 = scmp.eq.s32.totalorder %s27, 0
      %p140 = por %p138, %p139
      %p141 = scmp.ne.s32.totalorder %s127, %s128
      %p142 = scmp.eq.s32.totalorder %s28, 1
      %p143 = por %p141, %p142
      %p145 = scmp.ne.s32.totalorder %s128, %s144
      %p146 = scmp.eq.s32.totalorder %s28, 0
      %p147 = por %p145, %p146
      %s148 = ssub.s32 %s29, %s41
      %s149 = ssub.s32 %s30, %s37
      %s150 = sor.u32 %s148, %s149
      %p151 = scmp.eq.s32.totalorder %s150, 0
      %s153 = sadd.s32 %s152, 1
      %s154 = scalar_select %p151, %s152, %s153
      %p157 = pneg %p151
      %p158 = scmp.eq.s32.totalorder %s22, 1
      %p159 = por %p157, %p158
      %p160 = scmp.ne.s32.totalorder %s152, %s155
      %p161 = scmp.eq.s32.totalorder %s22, 0
      %p162 = por %p160, %p161
      %p163 = scmp.ne.s32.totalorder %s152, %s155
      %p164 = scmp.eq.s32.totalorder %s27, 1
      %p165 = por %p163, %p164
      %p166 = scmp.ne.s32.totalorder %s155, %s156
      %p167 = scmp.eq.s32.totalorder %s27, 0
      %p168 = por %p166, %p167
      %p169 = scmp.ne.s32.totalorder %s155, %s156
      %p170 = scmp.eq.s32.totalorder %s28, 1
      %p171 = por %p169, %p170
      %p173 = scmp.ne.s32.totalorder %s156, %s172
      %p174 = scmp.eq.s32.totalorder %s28, 0
      %p175 = por %p173, %p174
      %p176 = scmp.le.s32.totalorder 1, %s22
      %p177 = scmp.lt.s32.totalorder %s22, 3
      %p178 = pnand %p176, %p177
      %p179 = pneg %p178
      // Predicated region
      $region9: #{tpu_custom_call.1} parent=5 // pred_check
        _
      $region10: #{tpu_custom_call.1} parent=5 // pred_check_branch
        %181 = sbr.rel (%p178) target = $region12
      $region11: #{tpu_custom_call.1} parent=5 // pred_region
        %s182 = ssub.s32 %s22, 1
      $region12: #{tpu_custom_call.1} parent=5 // pred_fallthru
        _
      %p183 = scmp.lt.s32.totalorder %s22, 2
      // Predicated region
      $region13: #{tpu_custom_call.1} parent=5 // pred_check
        %p184 = pneg %p183
      $region14: #{tpu_custom_call.1} parent=5 // pred_check_branch
        %186 = sbr.rel (%p184) target = $region16
      $region15: #{tpu_custom_call.1} parent=5 // pred_region
        // Predicated region
        $region17: #{tpu_custom_call.1} parent=15 // pred_check
          %p187 = pneg %p56
        $region18: #{tpu_custom_call.1} parent=15 // pred_check_branch
          %189 = sbr.rel (%p187) target = $region20
        $region19: #{tpu_custom_call.1} parent=15 // pred_region
          %s190 = sand.u32 %s46, 1
          %s191 = scalar_lea.sflag [#allocation3], %s190
          %s192 = sand.u32 %s46, 1
          %s193 = smul.addr %s192, 32
          %s194 = scalar_lea.vmem [#allocation2], %s193
          %s195 = smul.u32 4, %s29
          %s196 = smul.u32 4, %s30
          %s197 = ssub.s32 1, %s195
          %s198 = smul.u32 2, %s197
          %s199 = smul.u32 %s198, 4
          %s200 = ssub.s32 32, %s199
          %s201 = sshll.u32 %s200, 4
          %202 = vsyncadd %s191, %s201
          %p203 = scmp.ne.s32.totalorder 0, %s199
          %s204 = smul.addr %s195, 8
          %s205 = sadd.s32 %s196, %s204
          %s206 = smul.addr %s205, 2
          %s207 = scalar_lea.hbm %s0, %s206
          %s208 = smul.u32 8, %s197
          %s209 = sshll.u32 %s207, 4
          %s210 = int_to_ptr.hbm [resolvable:$true] %s209
          %s211 = sshll.u32 %s194, 4
          %s212 = int_to_ptr.vmem [resolvable:$true] %s211
          %s213 = sshll.u32 %s208, 4
          %217 = dma.hbm_to_vmem [thread:$0]  (%p203), %s210, %s213, %s212, %s191, 256, 128, 8
        $region20: #{tpu_custom_call.1} parent=15 // pred_fallthru
          _
        // Predicated region
        $region21: #{tpu_custom_call.1} parent=15 // pred_check
          %p218 = pneg %p82
        $region22: #{tpu_custom_call.1} parent=15 // pred_check_branch
          %220 = sbr.rel (%p218) target = $region24
        $region23: #{tpu_custom_call.1} parent=15 // pred_region
          %s221 = sand.u32 %s22, 1
          %s222 = scalar_lea.sflag [#allocation6], %s221
          %s223 = sand.u32 %s72, 1
          %s224 = smul.addr %s223, 4
          %s225 = scalar_lea.vmem [#allocation5], %s224
          %s226 = smul.u32 4, %s30
          %228 = vsyncadd %s222, 0
          %s229 = scalar_lea.hbm %s1, %s226
          %s231 = sshll.u32 %s229, 4
          %s232 = int_to_ptr.hbm [resolvable:$true] %s231
          %s233 = sshll.u32 %s225, 4
          %s234 = int_to_ptr.vmem [resolvable:$true] %s233
          %236 = dma.hbm_to_vmem [thread:$0]  %s232, 64, %s234, %s222
        $region24: #{tpu_custom_call.1} parent=15 // pred_fallthru
          _
        // Predicated region
        $region25: #{tpu_custom_call.1} parent=15 // pred_check
          %p237 = pneg %p108
        $region26: #{tpu_custom_call.1} parent=15 // pred_check_branch
          %239 = sbr.rel (%p237) target = $region28
        $region27: #{tpu_custom_call.1} parent=15 // pred_region
          %s240 = sand.u32 %s22, 1
          %s241 = scalar_lea.sflag [#allocation6], %s240
          %s242 = sand.u32 %s98, 1
          %s243 = smul.addr %s242, 4
          %s244 = scalar_lea.vmem [#allocation7], %s243
          %s245 = smul.u32 4, %s30
          %247 = vsyncadd %s241, 0
          %s248 = scalar_lea.hbm %s2, %s245
          %s250 = sshll.u32 %s248, 4
          %s251 = int_to_ptr.hbm [resolvable:$true] %s250
          %s252 = sshll.u32 %s244, 4
          %s253 = int_to_ptr.vmem [resolvable:$true] %s252
          %255 = dma.hbm_to_vmem [thread:$0]  %s251, 64, %s253, %s241
        $region28: #{tpu_custom_call.1} parent=15 // pred_fallthru
          _
        // Predicated region
        $region29: #{tpu_custom_call.1} parent=15 // pred_check
          %p256 = pneg %p134
        $region30: #{tpu_custom_call.1} parent=15 // pred_check_branch
          %258 = sbr.rel (%p256) target = $region32
        $region31: #{tpu_custom_call.1} parent=15 // pred_region
          %s259 = sand.u32 %s124, 1
          %s260 = scalar_lea.sflag [#allocation9], %s259
          %s261 = sand.u32 %s124, 1
          %s262 = smul.addr %s261, 4
          %s263 = scalar_lea.vmem [#allocation8], %s262
          %s264 = smul.u32 4, %s30
          %266 = vsyncadd %s260, 0
          %s267 = scalar_lea.hbm %s3, %s264
          %s269 = sshll.u32 %s267, 4
          %s270 = int_to_ptr.hbm [resolvable:$true] %s269
          %s271 = sshll.u32 %s263, 4
          %s272 = int_to_ptr.vmem [resolvable:$true] %s271
          %274 = dma.hbm_to_vmem [thread:$0]  %s270, 64, %s272, %s260
        $region32: #{tpu_custom_call.1} parent=15 // pred_fallthru
          _
      $region16: #{tpu_custom_call.1} parent=5 // pred_fallthru
        _
      %p275 = scmp.le.s32.totalorder 1, %s22
      %p276 = scmp.lt.s32.totalorder %s22, 3
      %p277 = pnand %p275, %p276
      %p278 = pneg %p277
      // Predicated region
      $region33: #{tpu_custom_call.1} parent=5 // pred_check
        _
      $region34: #{tpu_custom_call.1} parent=5 // pred_check_branch
        %280 = sbr.rel (%p277) target = $region36
      $region35: #{tpu_custom_call.1} parent=5 // pred_region
        %s281 = ssub.s32 %s22, 1
        %s282 = sand.u32 %s49, 1
        %s283 = scalar_lea.sflag [#allocation3], %s282
        %s284 = sand.u32 %s49, 1
        %s285 = smul.addr %s284, 32
        %s286 = scalar_lea.vmem [#allocation2], %s285
        // Predicated region
        $region37: #{tpu_custom_call.1} parent=35 // pred_check
          %p287 = pneg %p62
        $region38: #{tpu_custom_call.1} parent=35 // pred_check_branch
          %289 = sbr.rel (%p287) target = $region40
        $region39: #{tpu_custom_call.1} parent=35 // pred_region
          %291 = dma.done %s283, 512
        $region40: #{tpu_custom_call.1} parent=35 // pred_fallthru
          _
        %s292 = sand.u32 %s27, 1
        %s293 = scalar_lea.sflag [#allocation6], %s292
        %s294 = sand.u32 %s75, 1
        %s295 = smul.addr %s294, 4
        %s296 = scalar_lea.vmem [#allocation5], %s295
        // Predicated region
        $region41: #{tpu_custom_call.1} parent=35 // pred_check
          %p297 = pneg %p88
        $region42: #{tpu_custom_call.1} parent=35 // pred_check_branch
          %299 = sbr.rel (%p297) target = $region44
        $region43: #{tpu_custom_call.1} parent=35 // pred_region
          %301 = dma.done %s293, 64
        $region44: #{tpu_custom_call.1} parent=35 // pred_fallthru
          _
        %s302 = sand.u32 %s27, 1
        %s303 = scalar_lea.sflag [#allocation6], %s302
        %s304 = sand.u32 %s101, 1
        %s305 = smul.addr %s304, 4
        %s306 = scalar_lea.vmem [#allocation7], %s305
        // Predicated region
        $region45: #{tpu_custom_call.1} parent=35 // pred_check
          %p307 = pneg %p114
        $region46: #{tpu_custom_call.1} parent=35 // pred_check_branch
          %309 = sbr.rel (%p307) target = $region48
        $region47: #{tpu_custom_call.1} parent=35 // pred_region
          %311 = dma.done %s303, 64
        $region48: #{tpu_custom_call.1} parent=35 // pred_fallthru
          _
        %s312 = sand.u32 %s127, 1
        %s313 = scalar_lea.sflag [#allocation9], %s312
        %s314 = sand.u32 %s127, 1
        %s315 = smul.addr %s314, 4
        %s316 = scalar_lea.vmem [#allocation8], %s315
        // Predicated region
        $region49: #{tpu_custom_call.1} parent=35 // pred_check
          %p317 = pneg %p140
        $region50: #{tpu_custom_call.1} parent=35 // pred_check_branch
          %319 = sbr.rel (%p317) target = $region52
        $region51: #{tpu_custom_call.1} parent=35 // pred_region
          %321 = dma.done %s313, 64
        $region52: #{tpu_custom_call.1} parent=35 // pred_fallthru
          _
        %s322 = sand.u32 %s49, 1
        %s323 = scalar_lea.sflag [#allocation3], %s322
        %s324 = sand.u32 %s49, 1
        %s325 = smul.addr %s324, 32
        %s326 = scalar_lea.vmem [#allocation2], %s325
        %p327 = pneg %p62
        %p328 = pneg %p59
        %s329 = sand.u32 %s27, 1
        %s330 = scalar_lea.sflag [#allocation6], %s329
        %s331 = sand.u32 %s75, 1
        %s332 = smul.addr %s331, 4
        %s333 = scalar_lea.vmem [#allocation5], %s332
        %p334 = pneg %p88
        %p335 = pneg %p85
        %s336 = sand.u32 %s27, 1
        %s337 = scalar_lea.sflag [#allocation6], %s336
        %s338 = sand.u32 %s101, 1
        %s339 = smul.addr %s338, 4
        %s340 = scalar_lea.vmem [#allocation7], %s339
        %p341 = pneg %p114
        %p342 = pneg %p111
        %s343 = sand.u32 %s127, 1
        %s344 = scalar_lea.sflag [#allocation9], %s343
        %s345 = sand.u32 %s127, 1
        %s346 = smul.addr %s345, 4
        %s347 = scalar_lea.vmem [#allocation8], %s346
        %p348 = pneg %p140
        %p349 = pneg %p137
        %p350 = pneg %p168
        %p351 = pneg %p165
        %s352 = sand.u32 %s155, 1
        %s353 = scalar_lea.sflag [#allocation4], %s352
        %s354 = sand.u32 %s155, 1
        %s355 = smul.addr %s354, 32
        %s356 = scalar_lea.vmem [#allocation10], %s355
        %s357 = smul.u32 4, %s31
        %s358 = smul.u32 4, %s32
        %s359 = ssub.s32 1, %s357
        %s360 = smul.u32 2, %s359
        %s361 = smul.u32 %s360, 4
        %s362 = smul.u32 4, %s32
        %s363 = smul.u32 4, %s32
        %s364 = smul.u32 4, %s32
        %s365 = smul.u32 4, %s31
        %s366 = smul.u32 4, %s32
        %s367 = ssub.s32 1, %s365
        %s368 = smul.u32 2, %s367
        %s369 = smul.u32 %s368, 4
        %v370 = vld [vmem:[%s286] sm:$0xff]
        %v371 = vld [vmem:[%s286 + $0x8] sm:$0xff]
        %v372 = vld [vmem:[%s286 + $0x10] sm:$0xff]
        %v373 = vld [vmem:[%s286 + $0x18] sm:$0xff]
        %v374 = vld [vmem:[%s296] sm:$0xf]
        %v376 = vperm.slane %v374, 0
        %v377 = vperm.slane %v374, 1
        %v378 = vperm.slane %v374, 2
        %v379 = vperm.slane %v374, 3
        %v380 = vrot.slane %v377, 6
        %v381 = vrot.slane %v378, 4
        %v382 = vrot.slane %v379, 2
        %vm383 = vcmask 1041408
        %v384 = vsel %vm383, %v376, %v380
        %vm385 = vcmask 1045508
        %v386 = vsel %vm385, %v381, %v382
        %vm387 = vcmask 1043456
        %v388 = vsel %vm387, %v384, %v386
        %vm389 = vcmask 1043458
        %v390 = vsel %vm389, %v376, %v380
        %vm391 = vcmask 1045504
        %v392 = vsel %vm391, %v382, %v381
        %vm393 = vcmask 1045506
        %v394 = vsel %vm393, %v390, %v392
        %v395 = vrot.slane %v394, 2
        %v396 = vsel %vm385, %v376, %v380
        %v397 = vsel %vm383, %v381, %v382
        %v398 = vsel %vm387, %v397, %v396
        %v399 = vrot.slane %v398, 4
        %v400 = vsel %vm391, %v380, %v376
        %v401 = vsel %vm389, %v381, %v382
        %v402 = vsel %vm393, %v401, %v400
        %v403 = vrot.slane %v402, 6
        %v408 = vsub.f32 %v370, %v388
        %v409 = vsub.f32 %v371, %v395
        %v410 = vsub.f32 %v372, %v399
        %v411 = vsub.f32 %v373, %v403
        %v412 = vld [vmem:[%s306] sm:$0xf]
        %v414 = vperm.slane %v412, 0
        %v415 = vperm.slane %v412, 1
        %v416 = vperm.slane %v412, 2
        %v417 = vperm.slane %v412, 3
        %v418 = vrot.slane %v415, 6
        %v419 = vrot.slane %v416, 4
        %v420 = vrot.slane %v417, 2
        %v421 = vsel %vm383, %v414, %v418
        %v422 = vsel %vm385, %v419, %v420
        %v423 = vsel %vm387, %v421, %v422
        %v424 = vsel %vm389, %v414, %v418
        %v425 = vsel %vm391, %v420, %v419
        %v426 = vsel %vm393, %v424, %v425
        %v427 = vrot.slane %v426, 2
        %v428 = vsel %vm385, %v414, %v418
        %v429 = vsel %vm383, %v419, %v420
        %v430 = vsel %vm387, %v429, %v428
        %v431 = vrot.slane %v430, 4
        %v432 = vsel %vm391, %v418, %v414
        %v433 = vsel %vm389, %v419, %v420
        %v434 = vsel %vm393, %v433, %v432
        %v435 = vrot.slane %v434, 6
        %v440 = vmul.f32 %v408, %v423
        %v441 = vmul.f32 %v409, %v427
        %v442 = vmul.f32 %v410, %v431
        %v443 = vmul.f32 %v411, %v435
        %v444 = vld [vmem:[%s316] sm:$0xf]
        %v445 = vmul.f32 %v440, %v440
        %v446 = vmul.f32 %v441, %v441
        %v447 = vmul.f32 %v442, %v442
        %v448 = vmul.f32 %v443, %v443
        %v450 = vperm.slane %v444, 0
        %v451 = vperm.slane %v444, 1
        %v452 = vperm.slane %v444, 2
        %v453 = vperm.slane %v444, 3
        %462 = vst [vmem:[#allocation1] ss:$4 sm:$0xff] %v445
        %s463 = scalar_lea.vmem [#allocation1], 1
        %464 = vst [vmem:[%s463] ss:$4 sm:$0xff] %v446
        %s465 = scalar_lea.vmem [#allocation1], 2
        %466 = vst [vmem:[%s465] ss:$4 sm:$0xff] %v447
        %s467 = scalar_lea.vmem [#allocation1], 3
        %468 = vst [vmem:[%s467] ss:$4 sm:$0xff] %v448
        %v469 = vld.sshfl [vmem:[#allocation1] sm:$0xff pattern:$0x73625140]
        %v470 = vld.sshfl [vmem:[#allocation1 + $0x8] sm:$0xff pattern:$0x73625140]
        %v471 = vld.sshfl [vmem:[#allocation1 + $0x10] sm:$0xff pattern:$0x73625140]
        %v472 = vld.sshfl [vmem:[#allocation1 + $0x18] sm:$0xff pattern:$0x73625140]
        %v477 = vsub.f32 %v450, %v469
        %v478 = vsub.f32 %v451, %v470
        %v479 = vsub.f32 %v452, %v471
        %v480 = vsub.f32 %v453, %v472
        %v485 = vrot.slane %v478, 6
        %v486 = vrot.slane %v479, 4
        %v487 = vrot.slane %v480, 2
        %v488 = vsel %vm383, %v477, %v485
        %v489 = vsel %vm385, %v486, %v487
        %v490 = vsel %vm387, %v488, %v489
        %v491 = vsel %vm389, %v477, %v485
        %v492 = vsel %vm391, %v487, %v486
        %v493 = vsel %vm393, %v491, %v492
        %v494 = vrot.slane %v493, 2
        %v495 = vsel %vm385, %v477, %v485
        %v496 = vsel %vm383, %v486, %v487
        %v497 = vsel %vm387, %v496, %v495
        %v498 = vrot.slane %v497, 4
        %v499 = vsel %vm391, %v485, %v477
        %v500 = vsel %vm389, %v486, %v487
        %v501 = vsel %vm393, %v500, %v499
        %v502 = vrot.slane %v501, 6
        %507 = vst [vmem:[%s356] sm:$0xff] %v490
        %508 = vst [vmem:[%s356 + $0x8] sm:$0xff] %v494
        %509 = vst [vmem:[%s356 + $0x10] sm:$0xff] %v498
        %510 = vst [vmem:[%s356 + $0x18] sm:$0xff] %v502
        %s511 = sand.u32 %s155, 1
        %s512 = scalar_lea.sflag [#allocation4], %s511
        %s513 = sand.u32 %s155, 1
        %s514 = smul.addr %s513, 32
        %s515 = scalar_lea.vmem [#allocation10], %s514
        // Predicated region
        $region53: #{tpu_custom_call.1} parent=35 // pred_check
          %p516 = pneg %p165
        $region54: #{tpu_custom_call.1} parent=35 // pred_check_branch
          %518 = sbr.rel (%p516) target = $region56
        $region55: #{tpu_custom_call.1} parent=35 // pred_region
          %s519 = smul.u32 4, %s31
          %s520 = smul.u32 4, %s32
          %s521 = ssub.s32 1, %s519
          %s522 = smul.u32 2, %s521
          %s523 = smul.u32 %s522, 4
          %s524 = ssub.s32 32, %s523
          %s525 = sshll.u32 %s524, 4
          %526 = vsyncadd %s512, %s525
          %p527 = scmp.ne.s32.totalorder 0, %s523
          %s528 = smul.addr %s519, 8
          %s529 = sadd.s32 %s520, %s528
          %s530 = smul.addr %s529, 2
          %s531 = scalar_lea.hbm %s4, %s530
          %s532 = smul.u32 8, %s521
          %s533 = sshll.u32 %s515, 4
          %s534 = int_to_ptr.vmem [resolvable:$true] %s533
          %s535 = sshll.u32 %s531, 4
          %s536 = int_to_ptr.hbm [resolvable:$true] %s535
          %s537 = sshll.u32 %s532, 4
          %541 = dma.vmem_to_hbm [thread:$0]  (%p527), %s534, %s537, %s536, %s512, 128, 256, 8
        $region56: #{tpu_custom_call.1} parent=35 // pred_fallthru
          _
      $region36: #{tpu_custom_call.1} parent=5 // pred_fallthru
        _
      %p542 = scmp.le.s32.totalorder 2, %s22
      // Predicated region
      $region57: #{tpu_custom_call.1} parent=5 // pred_check
        %p543 = pneg %p542
      $region58: #{tpu_custom_call.1} parent=5 // pred_check_branch
        %545 = sbr.rel (%p543) target = $region60
      $region59: #{tpu_custom_call.1} parent=5 // pred_region
        %s546 = ssub.s32 %s22, 2
        // Predicated region
        $region61: #{tpu_custom_call.1} parent=59 // pred_check
          %p547 = pneg %p171
        $region62: #{tpu_custom_call.1} parent=59 // pred_check_branch
          %549 = sbr.rel (%p547) target = $region64
        $region63: #{tpu_custom_call.1} parent=59 // pred_region
          %s550 = sand.u32 %s156, 1
          %s551 = scalar_lea.sflag [#allocation4], %s550
          %s552 = sand.u32 %s156, 1
          %s553 = smul.addr %s552, 32
          %s554 = scalar_lea.vmem [#allocation10], %s553
          %556 = dma.done %s551, 512
        $region64: #{tpu_custom_call.1} parent=59 // pred_fallthru
          _
      $region60: #{tpu_custom_call.1} parent=5 // pred_fallthru
        _
    $region6: #{tpu_custom_call.1} parent=1 // loop_footer
      %s26 = sadd.s32 1, %s22
    $region7: #{tpu_custom_call.1} parent=1 // loop_footer_branch
      %21 = sbr.rel target = $region3
    $region8: #{tpu_custom_call.1} parent=1 // loop_exit
      _
    %557 = vsyncpa [#allocation3], 1
    %s558 = scalar_lea.sflag [#allocation3], 1
    %559 = vsyncpa %s558, 1
    %560 = vsyncpa [#allocation6], 1
    %s561 = scalar_lea.sflag [#allocation6], 1
    %562 = vsyncpa %s561, 1
    %563 = vsyncpa [#allocation9], 1
    %s564 = scalar_lea.sflag [#allocation9], 1
    %565 = vsyncpa %s564, 1
    %566 = vsyncpa [#allocation4], 1
    %s567 = scalar_lea.sflag [#allocation4], 1
    %568 = vsyncpa %s567, 1

</llo_original>
